<compile_context>
chip_gen: v5e
topology: v5e:2x2
jax: 0.10.0
libtpu: 0.0.40
codegen_flags: <defaults>
</compile_context>

<pallas_src>
import math
import jax
import jax.numpy as jnp
from jax.experimental import pallas as pl
from jax.experimental.pallas import tpu as pltpu

D_MODEL = 32
N_HEADS = 4
D_K = D_MODEL // N_HEADS
SEQ = 8
BATCH = 2


def anomaly_attention_kernel(x_ref, wqkv_ref, wot_ref, bo_ref,
                             out_ref, attn_ref, ctx_scratch):
    # x_ref:       (B*S, D)    batch folded into rows
    # wqkv_ref:    (D, 3*D)    [Wq.T | Wk.T | Wv.T]
    # wot_ref:     (D, D)      Wo.T
    # bo_ref:      (1, D)
    # out_ref:     (B*S, D)
    # attn_ref:    (B*S, H*S)  heads packed along lanes: row b*S+i, cols h*S:(h+1)*S
    # ctx_scratch: VMEM (B*S, D)
    D = D_MODEL
    S = SEQ
    scale = 1.0 / math.sqrt(D_K)

    # Single fused QKV projection: one MXU matmul, 3*D = 96 lanes wide.
    qkv = jnp.dot(x_ref[...], wqkv_ref[...], preferred_element_type=jnp.float32)

    for b in range(BATCH):
        r0 = b * S
        for h in range(N_HEADS):
            c0 = h * D_K
            q = qkv[r0:r0 + S, c0:c0 + D_K]                       # (S, dk)
            k = qkv[r0:r0 + S, D + c0:D + c0 + D_K]               # (S, dk)
            v = qkv[r0:r0 + S, 2 * D + c0:2 * D + c0 + D_K]       # (S, dk)

            # scores = Q K^T / sqrt(dk)
            scores = jax.lax.dot_general(q, k, (((1,), (1,)), ((), ())),
                                         preferred_element_type=jnp.float32) * scale
            scores = scores - jnp.max(scores, axis=-1, keepdims=True)
            e = jnp.exp(scores)
            inv = pl.reciprocal(jnp.sum(e, axis=-1, keepdims=True))   # exact reciprocal
            attn = e * inv                                            # (S, S)

            # Lane-dense packed attention store (one (B*S, H*S) output slab).
            attn_ref[r0:r0 + S, h * S:(h + 1) * S] = attn

            # Head context written into a static lane slice of the scratch slab.
            ctx_scratch[r0:r0 + S, c0:c0 + D_K] = jnp.dot(
                attn, v, preferred_element_type=jnp.float32)

    # Output projection: single (B*S, D) x (D, D) matmul + bias.
    out_ref[...] = jnp.dot(ctx_scratch[...], wot_ref[...],
                           preferred_element_type=jnp.float32) + bo_ref[...]


def anomaly_attention(x, wq, wk, wv, wo, bo):
    B, S, D = x.shape
    H = N_HEADS

    # Pre-transpose / fuse weights (PyTorch Linear stores (out, in); y = x @ W.T).
    wqkv = jnp.concatenate([wq.T, wk.T, wv.T], axis=1)     # (D, 3D)
    wot = wo.T                                             # (D, D)
    x2d = x.reshape(B * S, D)

    out2d, attn_packed = pl.pallas_call(
        anomaly_attention_kernel,
        out_shape=(
            jax.ShapeDtypeStruct((B * S, D), jnp.float32),
            jax.ShapeDtypeStruct((B * S, H * S), jnp.float32),
        ),
        in_specs=[
            pl.BlockSpec(memory_space=pltpu.MemorySpace.VMEM),   # x (folded)
            pl.BlockSpec(memory_space=pltpu.MemorySpace.VMEM),   # fused Wqkv
            pl.BlockSpec(memory_space=pltpu.MemorySpace.VMEM),   # Wo.T
            pl.BlockSpec(memory_space=pltpu.MemorySpace.VMEM),   # b_o
        ],
        out_specs=(
            pl.BlockSpec(memory_space=pltpu.MemorySpace.VMEM),
            pl.BlockSpec(memory_space=pltpu.MemorySpace.VMEM),
        ),
        scratch_shapes=[pltpu.VMEM((B * S, D), jnp.float32)],
    )(x2d, wqkv, wot, bo.reshape(1, D))

    out = out2d.reshape(B, S, D)
    # (B*S, H*S) -> (B, S, H, S) -> (B, H, S, S)
    attn = attn_packed.reshape(B, S, H, S).transpose(0, 2, 1, 3)

    # Association discrepancy: KL(avg-head attention || uniform prior), summed over keys.
    # Computed from the kernel's attention output (moved out of the kernel per review:
    # avoids a 1-lane masked store + extra output DMA; the reduction is trivial).
    eps = 1e-8
    avg = attn.mean(axis=1)
    a = avg + eps
    prior = 1.0 / S + eps
    assoc = jnp.sum(a * jnp.log(a / prior), axis=-1)
    return out, attn, assoc


def reference(x, wq, wk, wv, wo, bo):
    """Pure-JAX mirror of the PyTorch forward (eval mode) for verification."""
    B, S, D = x.shape
    q = (x @ wq.T).reshape(B, S, N_HEADS, D_K).transpose(0, 2, 1, 3)
    k = (x @ wk.T).reshape(B, S, N_HEADS, D_K).transpose(0, 2, 1, 3)
    v = (x @ wv.T).reshape(B, S, N_HEADS, D_K).transpose(0, 2, 1, 3)
    scores = jnp.einsum('bhqd,bhkd->bhqk', q, k) / math.sqrt(D_K)
    attn = jax.nn.softmax(scores, axis=-1)
    ctx = jnp.einsum('bhqk,bhkd->bhqd', attn, v).transpose(0, 2, 1, 3).reshape(B, S, D)
    out = ctx @ wo.T + bo
    avg = attn.mean(axis=1)
    eps = 1e-8
    a = avg + eps
    prior = 1.0 / S + eps
    assoc = jnp.sum(a * jnp.log(a / prior), axis=-1)
    return out, attn, assoc


if __name__ == "__main__":
    key = jax.random.PRNGKey(0)
    kx, kq, kk, kv, ko, kb = jax.random.split(key, 6)

    bound = 1.0 / math.sqrt(D_MODEL)
    x = jax.random.normal(kx, (BATCH, SEQ, D_MODEL), dtype=jnp.float32)
    wq = jax.random.uniform(kq, (D_MODEL, D_MODEL), jnp.float32, -bound, bound)
    wk = jax.random.uniform(kk, (D_MODEL, D_MODEL), jnp.float32, -bound, bound)
    wv = jax.random.uniform(kv, (D_MODEL, D_MODEL), jnp.float32, -bound, bound)
    wo = jax.random.uniform(ko, (D_MODEL, D_MODEL), jnp.float32, -bound, bound)
    bo = jax.random.uniform(kb, (D_MODEL,), jnp.float32, -bound, bound)

    out, attn, assoc = anomaly_attention(x, wq, wk, wv, wo, bo)
    jax.block_until_ready((out, attn, assoc))

    out_r, attn_r, assoc_r = reference(x, wq, wk, wv, wo, bo)
    assert out.shape == (BATCH, SEQ, D_MODEL)
    assert attn.shape == (BATCH, N_HEADS, SEQ, SEQ)
    assert assoc.shape == (BATCH, SEQ)
    assert jnp.allclose(out, out_r, atol=1e-5, rtol=1e-5)
    assert jnp.allclose(attn, attn_r, atol=1e-5, rtol=1e-5)
    assert jnp.allclose(assoc, assoc_r, atol=1e-5, rtol=1e-5)

    print("KERNEL_OK")
</pallas_src>

<mosaic_0001>
module attributes {stable_mosaic.version = 11 : i64} {
  func.func @anomaly_attention_kernel(%arg0: memref<16x32xf32, #tpu.memory_space<vmem>>, %arg1: memref<32x96xf32, #tpu.memory_space<vmem>>, %arg2: memref<32x32xf32, #tpu.memory_space<vmem>>, %arg3: memref<1x32xf32, #tpu.memory_space<vmem>>, %arg4: memref<16x32xf32, #tpu.memory_space<vmem>>, %arg5: memref<16x32xf32, #tpu.memory_space<vmem>>, %arg6: memref<16x32xf32, #tpu.memory_space<vmem>>) attributes {dimension_semantics = [], scalar_prefetch = 0 : i64, scratch_operands = 1 : i64, tpu.core_type = #tpu.core_type<tc>} {
    %c0 = arith.constant 0 : index
    %c0_0 = arith.constant 0 : index
    %0 = vector.load %arg0[%c0, %c0_0] : memref<16x32xf32, #tpu.memory_space<vmem>>, vector<16x32xf32>
    %c0_1 = arith.constant 0 : index
    %c0_2 = arith.constant 0 : index
    %1 = vector.load %arg1[%c0_1, %c0_2] : memref<32x96xf32, #tpu.memory_space<vmem>>, vector<32x96xf32>
    %cst = arith.constant dense<0.000000e+00> : vector<16x96xf32>
    %2 = tpu.matmul %0, %1, %cst {dimension_numbers = #tpu.dot_dimension_numbers<[1], [0], [0], [1], [0, 0, 1, 1], [], []>} : vector<16x32xf32>, vector<32x96xf32>, vector<16x96xf32> -> vector<16x96xf32>
    %3 = vector.extract_strided_slice %2 {offsets = [0, 0], sizes = [8, 8], strides = [1, 1]} : vector<16x96xf32> to vector<8x8xf32>
    %4 = vector.extract_strided_slice %2 {offsets = [0, 32], sizes = [8, 8], strides = [1, 1]} : vector<16x96xf32> to vector<8x8xf32>
    %5 = vector.extract_strided_slice %2 {offsets = [0, 64], sizes = [8, 8], strides = [1, 1]} : vector<16x96xf32> to vector<8x8xf32>
    %cst_3 = arith.constant dense<0.000000e+00> : vector<8x8xf32>
    %6 = tpu.matmul %3, %4, %cst_3 {dimension_numbers = #tpu.dot_dimension_numbers<[1], [1], [0], [0], [0, 0, 1, 0], [], []>} : vector<8x8xf32>, vector<8x8xf32>, vector<8x8xf32> -> vector<8x8xf32>
    %cst_4 = arith.constant 0.353553385 : f32
    %7 = vector.broadcast %cst_4 : f32 to vector<8x8xf32>
    %8 = arith.mulf %6, %7 : vector<8x8xf32>
    %cst_5 = arith.constant dense<0xFF800000> : vector<8xf32>
    %9 = vector.multi_reduction <maximumf>, %8, %cst_5 [1] : vector<8x8xf32> to vector<8xf32>
    %10 = vector.shape_cast %9 : vector<8xf32> to vector<8x1xf32>
    %11 = vector.broadcast %10 : vector<8x1xf32> to vector<8x8xf32>
    %12 = arith.subf %8, %11 : vector<8x8xf32>
    %13 = math.exp %12 : vector<8x8xf32>
    %cst_6 = arith.constant dense<0.000000e+00> : vector<8xf32>
    %14 = vector.multi_reduction <add>, %13, %cst_6 [1] : vector<8x8xf32> to vector<8xf32>
    %15 = vector.shape_cast %14 : vector<8xf32> to vector<8x1xf32>
    %16 = tpu.reciprocal %15 : vector<8x1xf32> -> vector<8x1xf32>
    %17 = vector.broadcast %16 : vector<8x1xf32> to vector<8x8xf32>
    %18 = arith.mulf %13, %17 : vector<8x8xf32>
    %c0_7 = arith.constant 0 : index
    %c0_8 = arith.constant 0 : index
    %19 = vector.load %arg5[%c0_7, %c0_8] : memref<16x32xf32, #tpu.memory_space<vmem>>, vector<8x8xf32>
    tpu.vector_store %arg5[%c0_7, %c0_8], %18 {strides = array<i32>} : memref<16x32xf32, #tpu.memory_space<vmem>>, vector<8x8xf32>,
    %cst_9 = arith.constant dense<0.000000e+00> : vector<8x8xf32>
    %20 = tpu.matmul %18, %5, %cst_9 {dimension_numbers = #tpu.dot_dimension_numbers<[1], [0], [0], [1], [0, 0, 1, 1], [], []>} : vector<8x8xf32>, vector<8x8xf32>, vector<8x8xf32> -> vector<8x8xf32>
    %c0_10 = arith.constant 0 : index
    %c0_11 = arith.constant 0 : index
    %21 = vector.load %arg6[%c0_10, %c0_11] : memref<16x32xf32, #tpu.memory_space<vmem>>, vector<8x8xf32>
    tpu.vector_store %arg6[%c0_10, %c0_11], %20 {strides = array<i32>} : memref<16x32xf32, #tpu.memory_space<vmem>>, vector<8x8xf32>,
    %22 = vector.extract_strided_slice %2 {offsets = [0, 8], sizes = [8, 8], strides = [1, 1]} : vector<16x96xf32> to vector<8x8xf32>
    %23 = vector.extract_strided_slice %2 {offsets = [0, 40], sizes = [8, 8], strides = [1, 1]} : vector<16x96xf32> to vector<8x8xf32>
    %24 = vector.extract_strided_slice %2 {offsets = [0, 72], sizes = [8, 8], strides = [1, 1]} : vector<16x96xf32> to vector<8x8xf32>
    %cst_12 = arith.constant dense<0.000000e+00> : vector<8x8xf32>
    %25 = tpu.matmul %22, %23, %cst_12 {dimension_numbers = #tpu.dot_dimension_numbers<[1], [1], [0], [0], [0, 0, 1, 0], [], []>} : vector<8x8xf32>, vector<8x8xf32>, vector<8x8xf32> -> vector<8x8xf32>
    %cst_13 = arith.constant 0.353553385 : f32
    %26 = vector.broadcast %cst_13 : f32 to vector<8x8xf32>
    %27 = arith.mulf %25, %26 : vector<8x8xf32>
    %cst_14 = arith.constant dense<0xFF800000> : vector<8xf32>
    %28 = vector.multi_reduction <maximumf>, %27, %cst_14 [1] : vector<8x8xf32> to vector<8xf32>
    %29 = vector.shape_cast %28 : vector<8xf32> to vector<8x1xf32>
    %30 = vector.broadcast %29 : vector<8x1xf32> to vector<8x8xf32>
    %31 = arith.subf %27, %30 : vector<8x8xf32>
    %32 = math.exp %31 : vector<8x8xf32>
    %cst_15 = arith.constant dense<0.000000e+00> : vector<8xf32>
    %33 = vector.multi_reduction <add>, %32, %cst_15 [1] : vector<8x8xf32> to vector<8xf32>
    %34 = vector.shape_cast %33 : vector<8xf32> to vector<8x1xf32>
    %35 = tpu.reciprocal %34 : vector<8x1xf32> -> vector<8x1xf32>
    %36 = vector.broadcast %35 : vector<8x1xf32> to vector<8x8xf32>
    %37 = arith.mulf %32, %36 : vector<8x8xf32>
    %c0_16 = arith.constant 0 : index
    %c8 = arith.constant 8 : index
    %38 = vector.load %arg5[%c0_16, %c8] : memref<16x32xf32, #tpu.memory_space<vmem>>, vector<8x8xf32>
    tpu.vector_store %arg5[%c0_16, %c8], %37 {strides = array<i32>} : memref<16x32xf32, #tpu.memory_space<vmem>>, vector<8x8xf32>,
    %cst_17 = arith.constant dense<0.000000e+00> : vector<8x8xf32>
    %39 = tpu.matmul %37, %24, %cst_17 {dimension_numbers = #tpu.dot_dimension_numbers<[1], [0], [0], [1], [0, 0, 1, 1], [], []>} : vector<8x8xf32>, vector<8x8xf32>, vector<8x8xf32> -> vector<8x8xf32>
    %c0_18 = arith.constant 0 : index
    %c8_19 = arith.constant 8 : index
    %40 = vector.load %arg6[%c0_18, %c8_19] : memref<16x32xf32, #tpu.memory_space<vmem>>, vector<8x8xf32>
    tpu.vector_store %arg6[%c0_18, %c8_19], %39 {strides = array<i32>} : memref<16x32xf32, #tpu.memory_space<vmem>>, vector<8x8xf32>,
    %41 = vector.extract_strided_slice %2 {offsets = [0, 16], sizes = [8, 8], strides = [1, 1]} : vector<16x96xf32> to vector<8x8xf32>
    %42 = vector.extract_strided_slice %2 {offsets = [0, 48], sizes = [8, 8], strides = [1, 1]} : vector<16x96xf32> to vector<8x8xf32>
    %43 = vector.extract_strided_slice %2 {offsets = [0, 80], sizes = [8, 8], strides = [1, 1]} : vector<16x96xf32> to vector<8x8xf32>
    %cst_20 = arith.constant dense<0.000000e+00> : vector<8x8xf32>
    %44 = tpu.matmul %41, %42, %cst_20 {dimension_numbers = #tpu.dot_dimension_numbers<[1], [1], [0], [0], [0, 0, 1, 0], [], []>} : vector<8x8xf32>, vector<8x8xf32>, vector<8x8xf32> -> vector<8x8xf32>
    %cst_21 = arith.constant 0.353553385 : f32
    %45 = vector.broadcast %cst_21 : f32 to vector<8x8xf32>
    %46 = arith.mulf %44, %45 : vector<8x8xf32>
    %cst_22 = arith.constant dense<0xFF800000> : vector<8xf32>
    %47 = vector.multi_reduction <maximumf>, %46, %cst_22 [1] : vector<8x8xf32> to vector<8xf32>
    %48 = vector.shape_cast %47 : vector<8xf32> to vector<8x1xf32>
    %49 = vector.broadcast %48 : vector<8x1xf32> to vector<8x8xf32>
    %50 = arith.subf %46, %49 : vector<8x8xf32>
    %51 = math.exp %50 : vector<8x8xf32>
    %cst_23 = arith.constant dense<0.000000e+00> : vector<8xf32>
    %52 = vector.multi_reduction <add>, %51, %cst_23 [1] : vector<8x8xf32> to vector<8xf32>
    %53 = vector.shape_cast %52 : vector<8xf32> to vector<8x1xf32>
    %54 = tpu.reciprocal %53 : vector<8x1xf32> -> vector<8x1xf32>
    %55 = vector.broadcast %54 : vector<8x1xf32> to vector<8x8xf32>
    %56 = arith.mulf %51, %55 : vector<8x8xf32>
    %c0_24 = arith.constant 0 : index
    %c16 = arith.constant 16 : index
    %57 = vector.load %arg5[%c0_24, %c16] : memref<16x32xf32, #tpu.memory_space<vmem>>, vector<8x8xf32>
    tpu.vector_store %arg5[%c0_24, %c16], %56 {strides = array<i32>} : memref<16x32xf32, #tpu.memory_space<vmem>>, vector<8x8xf32>,
    %cst_25 = arith.constant dense<0.000000e+00> : vector<8x8xf32>
    %58 = tpu.matmul %56, %43, %cst_25 {dimension_numbers = #tpu.dot_dimension_numbers<[1], [0], [0], [1], [0, 0, 1, 1], [], []>} : vector<8x8xf32>, vector<8x8xf32>, vector<8x8xf32> -> vector<8x8xf32>
    %c0_26 = arith.constant 0 : index
    %c16_27 = arith.constant 16 : index
    %59 = vector.load %arg6[%c0_26, %c16_27] : memref<16x32xf32, #tpu.memory_space<vmem>>, vector<8x8xf32>
    tpu.vector_store %arg6[%c0_26, %c16_27], %58 {strides = array<i32>} : memref<16x32xf32, #tpu.memory_space<vmem>>, vector<8x8xf32>,
    %60 = vector.extract_strided_slice %2 {offsets = [0, 24], sizes = [8, 8], strides = [1, 1]} : vector<16x96xf32> to vector<8x8xf32>
    %61 = vector.extract_strided_slice %2 {offsets = [0, 56], sizes = [8, 8], strides = [1, 1]} : vector<16x96xf32> to vector<8x8xf32>
    %62 = vector.extract_strided_slice %2 {offsets = [0, 88], sizes = [8, 8], strides = [1, 1]} : vector<16x96xf32> to vector<8x8xf32>
    %cst_28 = arith.constant dense<0.000000e+00> : vector<8x8xf32>
    %63 = tpu.matmul %60, %61, %cst_28 {dimension_numbers = #tpu.dot_dimension_numbers<[1], [1], [0], [0], [0, 0, 1, 0], [], []>} : vector<8x8xf32>, vector<8x8xf32>, vector<8x8xf32> -> vector<8x8xf32>
    %cst_29 = arith.constant 0.353553385 : f32
    %64 = vector.broadcast %cst_29 : f32 to vector<8x8xf32>
    %65 = arith.mulf %63, %64 : vector<8x8xf32>
    %cst_30 = arith.constant dense<0xFF800000> : vector<8xf32>
    %66 = vector.multi_reduction <maximumf>, %65, %cst_30 [1] : vector<8x8xf32> to vector<8xf32>
    %67 = vector.shape_cast %66 : vector<8xf32> to vector<8x1xf32>
    %68 = vector.broadcast %67 : vector<8x1xf32> to vector<8x8xf32>
    %69 = arith.subf %65, %68 : vector<8x8xf32>
    %70 = math.exp %69 : vector<8x8xf32>
    %cst_31 = arith.constant dense<0.000000e+00> : vector<8xf32>
    %71 = vector.multi_reduction <add>, %70, %cst_31 [1] : vector<8x8xf32> to vector<8xf32>
    %72 = vector.shape_cast %71 : vector<8xf32> to vector<8x1xf32>
    %73 = tpu.reciprocal %72 : vector<8x1xf32> -> vector<8x1xf32>
    %74 = vector.broadcast %73 : vector<8x1xf32> to vector<8x8xf32>
    %75 = arith.mulf %70, %74 : vector<8x8xf32>
    %c0_32 = arith.constant 0 : index
    %c24 = arith.constant 24 : index
    %76 = vector.load %arg5[%c0_32, %c24] : memref<16x32xf32, #tpu.memory_space<vmem>>, vector<8x8xf32>
    tpu.vector_store %arg5[%c0_32, %c24], %75 {strides = array<i32>} : memref<16x32xf32, #tpu.memory_space<vmem>>, vector<8x8xf32>,
    %cst_33 = arith.constant dense<0.000000e+00> : vector<8x8xf32>
    %77 = tpu.matmul %75, %62, %cst_33 {dimension_numbers = #tpu.dot_dimension_numbers<[1], [0], [0], [1], [0, 0, 1, 1], [], []>} : vector<8x8xf32>, vector<8x8xf32>, vector<8x8xf32> -> vector<8x8xf32>
    %c0_34 = arith.constant 0 : index
    %c24_35 = arith.constant 24 : index
    %78 = vector.load %arg6[%c0_34, %c24_35] : memref<16x32xf32, #tpu.memory_space<vmem>>, vector<8x8xf32>
    tpu.vector_store %arg6[%c0_34, %c24_35], %77 {strides = array<i32>} : memref<16x32xf32, #tpu.memory_space<vmem>>, vector<8x8xf32>,
    %79 = vector.extract_strided_slice %2 {offsets = [8, 0], sizes = [8, 8], strides = [1, 1]} : vector<16x96xf32> to vector<8x8xf32>
    %80 = vector.extract_strided_slice %2 {offsets = [8, 32], sizes = [8, 8], strides = [1, 1]} : vector<16x96xf32> to vector<8x8xf32>
    %81 = vector.extract_strided_slice %2 {offsets = [8, 64], sizes = [8, 8], strides = [1, 1]} : vector<16x96xf32> to vector<8x8xf32>
    %cst_36 = arith.constant dense<0.000000e+00> : vector<8x8xf32>
    %82 = tpu.matmul %79, %80, %cst_36 {dimension_numbers = #tpu.dot_dimension_numbers<[1], [1], [0], [0], [0, 0, 1, 0], [], []>} : vector<8x8xf32>, vector<8x8xf32>, vector<8x8xf32> -> vector<8x8xf32>
    %cst_37 = arith.constant 0.353553385 : f32
    %83 = vector.broadcast %cst_37 : f32 to vector<8x8xf32>
    %84 = arith.mulf %82, %83 : vector<8x8xf32>
    %cst_38 = arith.constant dense<0xFF800000> : vector<8xf32>
    %85 = vector.multi_reduction <maximumf>, %84, %cst_38 [1] : vector<8x8xf32> to vector<8xf32>
    %86 = vector.shape_cast %85 : vector<8xf32> to vector<8x1xf32>
    %87 = vector.broadcast %86 : vector<8x1xf32> to vector<8x8xf32>
    %88 = arith.subf %84, %87 : vector<8x8xf32>
    %89 = math.exp %88 : vector<8x8xf32>
    %cst_39 = arith.constant dense<0.000000e+00> : vector<8xf32>
    %90 = vector.multi_reduction <add>, %89, %cst_39 [1] : vector<8x8xf32> to vector<8xf32>
    %91 = vector.shape_cast %90 : vector<8xf32> to vector<8x1xf32>
    %92 = tpu.reciprocal %91 : vector<8x1xf32> -> vector<8x1xf32>
    %93 = vector.broadcast %92 : vector<8x1xf32> to vector<8x8xf32>
    %94 = arith.mulf %89, %93 : vector<8x8xf32>
    %c8_40 = arith.constant 8 : index
    %c0_41 = arith.constant 0 : index
    %95 = vector.load %arg5[%c8_40, %c0_41] : memref<16x32xf32, #tpu.memory_space<vmem>>, vector<8x8xf32>
    tpu.vector_store %arg5[%c8_40, %c0_41], %94 {strides = array<i32>} : memref<16x32xf32, #tpu.memory_space<vmem>>, vector<8x8xf32>,
    %cst_42 = arith.constant dense<0.000000e+00> : vector<8x8xf32>
    %96 = tpu.matmul %94, %81, %cst_42 {dimension_numbers = #tpu.dot_dimension_numbers<[1], [0], [0], [1], [0, 0, 1, 1], [], []>} : vector<8x8xf32>, vector<8x8xf32>, vector<8x8xf32> -> vector<8x8xf32>
    %c8_43 = arith.constant 8 : index
    %c0_44 = arith.constant 0 : index
    %97 = vector.load %arg6[%c8_43, %c0_44] : memref<16x32xf32, #tpu.memory_space<vmem>>, vector<8x8xf32>
    tpu.vector_store %arg6[%c8_43, %c0_44], %96 {strides = array<i32>} : memref<16x32xf32, #tpu.memory_space<vmem>>, vector<8x8xf32>,
    %98 = vector.extract_strided_slice %2 {offsets = [8, 8], sizes = [8, 8], strides = [1, 1]} : vector<16x96xf32> to vector<8x8xf32>
    %99 = vector.extract_strided_slice %2 {offsets = [8, 40], sizes = [8, 8], strides = [1, 1]} : vector<16x96xf32> to vector<8x8xf32>
    %100 = vector.extract_strided_slice %2 {offsets = [8, 72], sizes = [8, 8], strides = [1, 1]} : vector<16x96xf32> to vector<8x8xf32>
    %cst_45 = arith.constant dense<0.000000e+00> : vector<8x8xf32>
    %101 = tpu.matmul %98, %99, %cst_45 {dimension_numbers = #tpu.dot_dimension_numbers<[1], [1], [0], [0], [0, 0, 1, 0], [], []>} : vector<8x8xf32>, vector<8x8xf32>, vector<8x8xf32> -> vector<8x8xf32>
    %cst_46 = arith.constant 0.353553385 : f32
    %102 = vector.broadcast %cst_46 : f32 to vector<8x8xf32>
    %103 = arith.mulf %101, %102 : vector<8x8xf32>
    %cst_47 = arith.constant dense<0xFF800000> : vector<8xf32>
    %104 = vector.multi_reduction <maximumf>, %103, %cst_47 [1] : vector<8x8xf32> to vector<8xf32>
    %105 = vector.shape_cast %104 : vector<8xf32> to vector<8x1xf32>
    %106 = vector.broadcast %105 : vector<8x1xf32> to vector<8x8xf32>
    %107 = arith.subf %103, %106 : vector<8x8xf32>
    %108 = math.exp %107 : vector<8x8xf32>
    %cst_48 = arith.constant dense<0.000000e+00> : vector<8xf32>
    %109 = vector.multi_reduction <add>, %108, %cst_48 [1] : vector<8x8xf32> to vector<8xf32>
    %110 = vector.shape_cast %109 : vector<8xf32> to vector<8x1xf32>
    %111 = tpu.reciprocal %110 : vector<8x1xf32> -> vector<8x1xf32>
    %112 = vector.broadcast %111 : vector<8x1xf32> to vector<8x8xf32>
    %113 = arith.mulf %108, %112 : vector<8x8xf32>
    %c8_49 = arith.constant 8 : index
    %c8_50 = arith.constant 8 : index
    %114 = vector.load %arg5[%c8_49, %c8_50] : memref<16x32xf32, #tpu.memory_space<vmem>>, vector<8x8xf32>
    tpu.vector_store %arg5[%c8_49, %c8_50], %113 {strides = array<i32>} : memref<16x32xf32, #tpu.memory_space<vmem>>, vector<8x8xf32>,
    %cst_51 = arith.constant dense<0.000000e+00> : vector<8x8xf32>
    %115 = tpu.matmul %113, %100, %cst_51 {dimension_numbers = #tpu.dot_dimension_numbers<[1], [0], [0], [1], [0, 0, 1, 1], [], []>} : vector<8x8xf32>, vector<8x8xf32>, vector<8x8xf32> -> vector<8x8xf32>
    %c8_52 = arith.constant 8 : index
    %c8_53 = arith.constant 8 : index
    %116 = vector.load %arg6[%c8_52, %c8_53] : memref<16x32xf32, #tpu.memory_space<vmem>>, vector<8x8xf32>
    tpu.vector_store %arg6[%c8_52, %c8_53], %115 {strides = array<i32>} : memref<16x32xf32, #tpu.memory_space<vmem>>, vector<8x8xf32>,
    %117 = vector.extract_strided_slice %2 {offsets = [8, 16], sizes = [8, 8], strides = [1, 1]} : vector<16x96xf32> to vector<8x8xf32>
    %118 = vector.extract_strided_slice %2 {offsets = [8, 48], sizes = [8, 8], strides = [1, 1]} : vector<16x96xf32> to vector<8x8xf32>
    %119 = vector.extract_strided_slice %2 {offsets = [8, 80], sizes = [8, 8], strides = [1, 1]} : vector<16x96xf32> to vector<8x8xf32>
    %cst_54 = arith.constant dense<0.000000e+00> : vector<8x8xf32>
    %120 = tpu.matmul %117, %118, %cst_54 {dimension_numbers = #tpu.dot_dimension_numbers<[1], [1], [0], [0], [0, 0, 1, 0], [], []>} : vector<8x8xf32>, vector<8x8xf32>, vector<8x8xf32> -> vector<8x8xf32>
    %cst_55 = arith.constant 0.353553385 : f32
    %121 = vector.broadcast %cst_55 : f32 to vector<8x8xf32>
    %122 = arith.mulf %120, %121 : vector<8x8xf32>
    %cst_56 = arith.constant dense<0xFF800000> : vector<8xf32>
    %123 = vector.multi_reduction <maximumf>, %122, %cst_56 [1] : vector<8x8xf32> to vector<8xf32>
    %124 = vector.shape_cast %123 : vector<8xf32> to vector<8x1xf32>
    %125 = vector.broadcast %124 : vector<8x1xf32> to vector<8x8xf32>
    %126 = arith.subf %122, %125 : vector<8x8xf32>
    %127 = math.exp %126 : vector<8x8xf32>
    %cst_57 = arith.constant dense<0.000000e+00> : vector<8xf32>
    %128 = vector.multi_reduction <add>, %127, %cst_57 [1] : vector<8x8xf32> to vector<8xf32>
    %129 = vector.shape_cast %128 : vector<8xf32> to vector<8x1xf32>
    %130 = tpu.reciprocal %129 : vector<8x1xf32> -> vector<8x1xf32>
    %131 = vector.broadcast %130 : vector<8x1xf32> to vector<8x8xf32>
    %132 = arith.mulf %127, %131 : vector<8x8xf32>
    %c8_58 = arith.constant 8 : index
    %c16_59 = arith.constant 16 : index
    %133 = vector.load %arg5[%c8_58, %c16_59] : memref<16x32xf32, #tpu.memory_space<vmem>>, vector<8x8xf32>
    tpu.vector_store %arg5[%c8_58, %c16_59], %132 {strides = array<i32>} : memref<16x32xf32, #tpu.memory_space<vmem>>, vector<8x8xf32>,
    %cst_60 = arith.constant dense<0.000000e+00> : vector<8x8xf32>
    %134 = tpu.matmul %132, %119, %cst_60 {dimension_numbers = #tpu.dot_dimension_numbers<[1], [0], [0], [1], [0, 0, 1, 1], [], []>} : vector<8x8xf32>, vector<8x8xf32>, vector<8x8xf32> -> vector<8x8xf32>
    %c8_61 = arith.constant 8 : index
    %c16_62 = arith.constant 16 : index
    %135 = vector.load %arg6[%c8_61, %c16_62] : memref<16x32xf32, #tpu.memory_space<vmem>>, vector<8x8xf32>
    tpu.vector_store %arg6[%c8_61, %c16_62], %134 {strides = array<i32>} : memref<16x32xf32, #tpu.memory_space<vmem>>, vector<8x8xf32>,
    %136 = vector.extract_strided_slice %2 {offsets = [8, 24], sizes = [8, 8], strides = [1, 1]} : vector<16x96xf32> to vector<8x8xf32>
    %137 = vector.extract_strided_slice %2 {offsets = [8, 56], sizes = [8, 8], strides = [1, 1]} : vector<16x96xf32> to vector<8x8xf32>
    %138 = vector.extract_strided_slice %2 {offsets = [8, 88], sizes = [8, 8], strides = [1, 1]} : vector<16x96xf32> to vector<8x8xf32>
    %cst_63 = arith.constant dense<0.000000e+00> : vector<8x8xf32>
    %139 = tpu.matmul %136, %137, %cst_63 {dimension_numbers = #tpu.dot_dimension_numbers<[1], [1], [0], [0], [0, 0, 1, 0], [], []>} : vector<8x8xf32>, vector<8x8xf32>, vector<8x8xf32> -> vector<8x8xf32>
    %cst_64 = arith.constant 0.353553385 : f32
    %140 = vector.broadcast %cst_64 : f32 to vector<8x8xf32>
    %141 = arith.mulf %139, %140 : vector<8x8xf32>
    %cst_65 = arith.constant dense<0xFF800000> : vector<8xf32>
    %142 = vector.multi_reduction <maximumf>, %141, %cst_65 [1] : vector<8x8xf32> to vector<8xf32>
    %143 = vector.shape_cast %142 : vector<8xf32> to vector<8x1xf32>
    %144 = vector.broadcast %143 : vector<8x1xf32> to vector<8x8xf32>
    %145 = arith.subf %141, %144 : vector<8x8xf32>
    %146 = math.exp %145 : vector<8x8xf32>
    %cst_66 = arith.constant dense<0.000000e+00> : vector<8xf32>
    %147 = vector.multi_reduction <add>, %146, %cst_66 [1] : vector<8x8xf32> to vector<8xf32>
    %148 = vector.shape_cast %147 : vector<8xf32> to vector<8x1xf32>
    %149 = tpu.reciprocal %148 : vector<8x1xf32> -> vector<8x1xf32>
    %150 = vector.broadcast %149 : vector<8x1xf32> to vector<8x8xf32>
    %151 = arith.mulf %146, %150 : vector<8x8xf32>
    %c8_67 = arith.constant 8 : index
    %c24_68 = arith.constant 24 : index
    %152 = vector.load %arg5[%c8_67, %c24_68] : memref<16x32xf32, #tpu.memory_space<vmem>>, vector<8x8xf32>
    tpu.vector_store %arg5[%c8_67, %c24_68], %151 {strides = array<i32>} : memref<16x32xf32, #tpu.memory_space<vmem>>, vector<8x8xf32>,
    %cst_69 = arith.constant dense<0.000000e+00> : vector<8x8xf32>
    %153 = tpu.matmul %151, %138, %cst_69 {dimension_numbers = #tpu.dot_dimension_numbers<[1], [0], [0], [1], [0, 0, 1, 1], [], []>} : vector<8x8xf32>, vector<8x8xf32>, vector<8x8xf32> -> vector<8x8xf32>
    %c8_70 = arith.constant 8 : index
    %c24_71 = arith.constant 24 : index
    %154 = vector.load %arg6[%c8_70, %c24_71] : memref<16x32xf32, #tpu.memory_space<vmem>>, vector<8x8xf32>
    tpu.vector_store %arg6[%c8_70, %c24_71], %153 {strides = array<i32>} : memref<16x32xf32, #tpu.memory_space<vmem>>, vector<8x8xf32>,
    %c0_72 = arith.constant 0 : index
    %c0_73 = arith.constant 0 : index
    %155 = vector.load %arg6[%c0_72, %c0_73] : memref<16x32xf32, #tpu.memory_space<vmem>>, vector<16x32xf32>
    %c0_74 = arith.constant 0 : index
    %c0_75 = arith.constant 0 : index
    %156 = vector.load %arg2[%c0_74, %c0_75] : memref<32x32xf32, #tpu.memory_space<vmem>>, vector<32x32xf32>
    %cst_76 = arith.constant dense<0.000000e+00> : vector<16x32xf32>
    %157 = tpu.matmul %155, %156, %cst_76 {dimension_numbers = #tpu.dot_dimension_numbers<[1], [0], [0], [1], [0, 0, 1, 1], [], []>} : vector<16x32xf32>, vector<32x32xf32>, vector<16x32xf32> -> vector<16x32xf32>
    %c0_77 = arith.constant 0 : index
    %c0_78 = arith.constant 0 : index
    %158 = vector.load %arg3[%c0_77, %c0_78] : memref<1x32xf32, #tpu.memory_space<vmem>>, vector<1x32xf32>
    %159 = vector.broadcast %158 : vector<1x32xf32> to vector<16x32xf32>
    %160 = arith.addf %157, %159 : vector<16x32xf32>
    %c0_79 = arith.constant 0 : index
    %c0_80 = arith.constant 0 : index
    %161 = vector.load %arg4[%c0_79, %c0_80] : memref<16x32xf32, #tpu.memory_space<vmem>>, vector<16x32xf32>
    tpu.vector_store %arg4[%c0_79, %c0_80], %160 {strides = array<i32>} : memref<16x32xf32, #tpu.memory_space<vmem>>, vector<16x32xf32>,
    return
  }
}

</mosaic_0001>

<llo_original>
// kernel: tpu_custom_call.1
$region0: #{tpu_custom_call.1}
  #allocation0 [shape = 'u32[]', space=smem, size = 0x4, offset = 0x4, fixed_abs, tag = 'smem constant byte address 0x4 - core index']
  #allocation1 [shape = 'u32[72,128]{1,0:T(1,128)}', space=vmem, size = 0x9000, scoped, tag = 'internal scratch']
  #allocation2 [shape = 'f32[16,32]{1,0:T(8,128)}', space=vmem, size = 0x2000, scoped, tag = 'scratch operand']
  %s0 = inlined_call_operand.hbm [shape: f32[16,32], index: 0, kind: input, shape index: {}]
  %s1 = inlined_call_operand.hbm [shape: f32[32,96], index: 1, kind: input, shape index: {}]
  %s2 = inlined_call_operand.hbm [shape: f32[32,32], index: 2, kind: input, shape index: {}]
  %s3 = inlined_call_operand.vmem [shape: f32[1,32], index: 3, kind: input, shape index: {}]
  %s4 = inlined_call_operand.hbm [shape: f32[16,32], index: 4, kind: output, shape index: {0}]
  %s5 = inlined_call_operand.hbm [shape: f32[16,32], index: 5, kind: output, shape index: {1}]
  %6 = xla_tuple %s4, %s5
  %s7 = sld [smem:[#allocation0]]
  $region46: #{tpu_custom_call.1} parent=0
    _
  %s9 = ssub.s32 1, %s7
  %s10 = scalar_select 0, %s9, %s7
  $region1: #{tpu_custom_call.1} parent=0
    #allocation3 [shape = 'u8[8192]{0}', space=vmem, size = 0x2000, scoped, tag = 'input window, operand 0, single buffered']
    #allocation4 [shape = 's32[1]{0}', space=sflag, size = 0x4, scoped, tag = 'scoped memory for tpu_custom_call.1']
    #allocation5 [shape = 's32[1]{0}', space=sflag, size = 0x4, scoped, tag = 'scoped memory for tpu_custom_call.1']
    #allocation6 [shape = 'u8[16384]{0}', space=vmem, size = 0x4000, scoped, tag = 'input window, operand 1, single buffered']
    #allocation7 [shape = 's32[1]{0}', space=sflag, size = 0x4, scoped, tag = 'scoped memory for tpu_custom_call.1']
    #allocation8 [shape = 'u8[16384]{0}', space=vmem, size = 0x4000, scoped, tag = 'input window, operand 2, single buffered']
    #allocation9 [shape = 'u8[8192]{0}', space=vmem, size = 0x2000, scoped, tag = 'output window, operand 0, single buffered']
    #allocation10 [shape = 'u8[8192]{0}', space=vmem, size = 0x2000, scoped, tag = 'output window, operand 1, single buffered']
    #allocation11 [shape = 's32[1]{0}', space=sflag, size = 0x4, scoped, tag = 'scoped memory for tpu_custom_call.1']
    %11 = vsyncpa [#allocation4], 0
    %12 = vsyncpa [#allocation7], 0
    %13 = vsyncpa [#allocation5], 0
    %14 = vsyncpa [#allocation11], 0
    // Predicated region
    $region2: #{tpu_custom_call.1} parent=1 // pred_check
      _
    $region3: #{tpu_custom_call.1} parent=1 // pred_check_branch
      %16 = sbr.rel (0) target = $region5
    $region4: #{tpu_custom_call.1} parent=1 // pred_region
      %18 = vsyncadd [#allocation4], 0
      %s19 = sshll.u32 %s0, 4
      %s20 = int_to_ptr.hbm [resolvable:$true] %s19
      %s21 = sshll.u32 [#allocation3], 4
      %s22 = int_to_ptr.vmem [resolvable:$true] %s21
      %27 = dma.hbm_to_vmem [thread:$0]  %s20, 256, %s22, [#allocation4], 128, 128, 8
    $region5: #{tpu_custom_call.1} parent=1 // pred_fallthru
      _
    // Predicated region
    $region6: #{tpu_custom_call.1} parent=1 // pred_check
      _
    $region7: #{tpu_custom_call.1} parent=1 // pred_check_branch
      %29 = sbr.rel (0) target = $region9
    $region8: #{tpu_custom_call.1} parent=1 // pred_region
      %31 = vsyncadd [#allocation7], 0
      %s32 = sshll.u32 %s1, 4
      %s33 = int_to_ptr.hbm [resolvable:$true] %s32
      %s34 = sshll.u32 [#allocation6], 4
      %s35 = int_to_ptr.vmem [resolvable:$true] %s34
      %40 = dma.hbm_to_vmem [thread:$0]  %s33, 512, %s35, [#allocation7], 128, 128, 8
    $region9: #{tpu_custom_call.1} parent=1 // pred_fallthru
      _
    // Predicated region
    $region10: #{tpu_custom_call.1} parent=1 // pred_check
      _
    $region11: #{tpu_custom_call.1} parent=1 // pred_check_branch
      %42 = sbr.rel (0) target = $region13
    $region12: #{tpu_custom_call.1} parent=1 // pred_region
      %44 = vsyncadd [#allocation7], 0
      %s45 = sshll.u32 %s2, 4
      %s46 = int_to_ptr.hbm [resolvable:$true] %s45
      %s47 = sshll.u32 [#allocation8], 4
      %s48 = int_to_ptr.vmem [resolvable:$true] %s47
      %53 = dma.hbm_to_vmem [thread:$0]  %s46, 512, %s48, [#allocation7], 128, 128, 8
    $region13: #{tpu_custom_call.1} parent=1 // pred_fallthru
      _
    // Predicated region
    $region14: #{tpu_custom_call.1} parent=1 // pred_check
      _
    $region15: #{tpu_custom_call.1} parent=1 // pred_check_branch
      %55 = sbr.rel (0) target = $region17
    $region16: #{tpu_custom_call.1} parent=1 // pred_region
      _
    $region17: #{tpu_custom_call.1} parent=1 // pred_fallthru
      _
    // Predicated region
    $region18: #{tpu_custom_call.1} parent=1 // pred_check
      _
    $region19: #{tpu_custom_call.1} parent=1 // pred_check_branch
      %57 = sbr.rel (0) target = $region21
    $region20: #{tpu_custom_call.1} parent=1 // pred_region
      %59 = dma.done [#allocation4], 256
    $region21: #{tpu_custom_call.1} parent=1 // pred_fallthru
      _
    // Predicated region
    $region22: #{tpu_custom_call.1} parent=1 // pred_check
      _
    $region23: #{tpu_custom_call.1} parent=1 // pred_check_branch
      %61 = sbr.rel (0) target = $region25
    $region24: #{tpu_custom_call.1} parent=1 // pred_region
      %63 = dma.done [#allocation7], 512
    $region25: #{tpu_custom_call.1} parent=1 // pred_fallthru
      _
    // Predicated region
    $region26: #{tpu_custom_call.1} parent=1 // pred_check
      _
    $region27: #{tpu_custom_call.1} parent=1 // pred_check_branch
      %65 = sbr.rel (0) target = $region29
    $region28: #{tpu_custom_call.1} parent=1 // pred_region
      %67 = dma.done [#allocation7], 512
    $region29: #{tpu_custom_call.1} parent=1 // pred_fallthru
      _
    %v68 = vld [vmem:[#allocation3] sm:$0xff]
    %v69 = vld [vmem:[#allocation3 + $0x8] sm:$0xff]
    %v70 = vld [vmem:[#allocation6] sm:$0xff]
    %v71 = vld [vmem:[#allocation6 + $0x8] sm:$0xff]
    %v72 = vld [vmem:[#allocation6 + $0x10] sm:$0xff]
    %v73 = vld [vmem:[#allocation6 + $0x18] sm:$0xff]
    %vm74 = vcmask 261120
    %v76 = vsel %vm74, %v68, 0
    %v79 = vsel %vm74, %v69, 0
    %81 = vmatpush.msra.mxu0 0.0
    %82 = vmatpush.msra.mxu0 0.0
    %83 = vmatpush.msra.mxu0 0.0
    %84 = vmatpush.msra.mxu0 0.0
    %85 = vmatpush.msra.mxu0 0.0
    %86 = vmatpush.msra.mxu0 0.0
    %87 = vmatpush.msra.mxu0 0.0
    %88 = vmatpush.msra.mxu0 0.0
    %89 = vmatpush.msra.mxu0 0.0
    %90 = vmatpush.msra.mxu0 0.0
    %91 = vmatpush.msra.mxu0 0.0
    %92 = vmatpush.msra.mxu0 0.0
    %93 = vmatpush.msra.mxu0 %v73
    %94 = vmatpush.msra.mxu0 %v72
    %95 = vmatpush.msra.mxu0 %v71
    %96 = vmatpush.msra.mxu0 %v70
    %97 = vmatmul.f32.gmra.mxu0 %v76
    %v98 = vpop.f32.mrf.mxu0
    %v99 = vadd.f32 0.0, %v98
    %100 = vmatmul.f32.gmra.mxu0 %v79
    %v101 = vpop.f32.mrf.mxu0
    %v102 = vadd.f32 0.0, %v101
    %103 = vdwg.mxu0
    %105 = vrot.lane.b32.xlu0 %v99, 96
    %v106 = vpop.permute.xlu0 %105
    %vm107 = vcmask 64512
    %v108 = vsel %vm107, %v99, 0
    %v110 = vsel %vm107, %v106, 0
    %112 = vmatpush.xpose.msra.mxu0 0.0
    %113 = vmatpush.xpose.msra.mxu0 0.0
    %114 = vmatpush.xpose.msra.mxu0 0.0
    %115 = vmatpush.xpose.msra.mxu0 0.0
    %116 = vmatpush.xpose.msra.mxu0 0.0
    %117 = vmatpush.xpose.msra.mxu0 0.0
    %118 = vmatpush.xpose.msra.mxu0 0.0
    %119 = vmatpush.xpose.msra.mxu0 0.0
    %120 = vmatpush.xpose.msra.mxu0 0.0
    %121 = vmatpush.xpose.msra.mxu0 0.0
    %122 = vmatpush.xpose.msra.mxu0 0.0
    %123 = vmatpush.xpose.msra.mxu0 0.0
    %124 = vmatpush.xpose.msra.mxu0 0.0
    %125 = vmatpush.xpose.msra.mxu0 0.0
    %126 = vmatpush.xpose.msra.mxu0 0.0
    %127 = vmatpush.xpose.msra.mxu0 %v110
    %128 = vmatmul.f32.gmra.mxu0 %v108
    %v129 = vpop.f32.mrf.mxu0
    %v130 = vadd.f32 0.0, %v129
    %131 = vdwg.mxu0
    %v132 = vmul.f32 %v130, 0.35355338
    %v133 = vsel %vm107, %v132, -inf
    %134 = vmax.xlane.f32.xlu0 %v133
    %v135 = vpop.xlane.xlu0 %134
    %v136 = vsub.f32 %v132, %v135
    %v137 = vmul.f32 %v136, 1.442695
    %v138 = vpow.pop %v137
    %v139 = vsel %vm107, %v138, 0.0
    %140 = vadd.xlane.f32.xlu0 %v139
    %v141 = vpop.xlane.xlu0 %140
    %v142 = vrcp.pop %v141
    %v143 = vmul.f32 %v141, %v142
    %v144 = vsub.f32 1.0, %v143
    %v145 = vmul.f32 %v142, %v144
    %v146 = vadd.f32 %v142, %v145
    %vm147 = vweird.f32 %v141
    %vm148 = vweird.f32 %v142
    %vm149 = vmor %vm147, %vm148
    %v150 = vsel %vm149, %v142, %v146
    %v151 = vand.u32 2147483647, %v141
    %vm152 = vcmp.eq.f32.partialorder %v151, 8.507059e+37
    %v153 = vand.u32 %v141, 2147483648
    %v154 = vor.u32 1.1754944e-38, %v153
    %v155 = vsel %vm152, %v154, %v150
    %v156 = vmul.f32 %v138, %v155
    %157 = vst.msk [vmem:[#allocation10] sm:$0xff] %vm107, %v156
    %158 = vrot.lane.b32.xlu0 %v99, 64
    %v159 = vpop.permute.xlu0 %158
    %v162 = vsel %vm107, %v156, 0
    %164 = vmatpush.msra.mxu0 0.0
    %165 = vmatpush.msra.mxu0 0.0
    %166 = vmatpush.msra.mxu0 0.0
    %167 = vmatpush.msra.mxu0 0.0
    %168 = vmatpush.msra.mxu0 0.0
    %169 = vmatpush.msra.mxu0 0.0
    %170 = vmatpush.msra.mxu0 0.0
    %171 = vmatpush.msra.mxu0 0.0
    %172 = vmatpush.msra.mxu0 0.0
    %173 = vmatpush.msra.mxu0 0.0
    %174 = vmatpush.msra.mxu0 0.0
    %175 = vmatpush.msra.mxu0 0.0
    %176 = vmatpush.msra.mxu0 0.0
    %177 = vmatpush.msra.mxu0 0.0
    %178 = vmatpush.msra.mxu0 0.0
    %179 = vmatpush.msra.mxu0 %v159
    %180 = vmatmul.f32.gmra.mxu0 %v162
    %v181 = vpop.f32.mrf.mxu0
    %v182 = vadd.f32 0.0, %v181
    %183 = vdwg.mxu0
    %184 = vst.msk [vmem:[#allocation2] sm:$0xff] %vm107, %v182
    %185 = vrot.lane.b32.xlu0 %v99, 120
    %v186 = vpop.permute.xlu0 %185
    %187 = vrot.lane.b32.xlu0 %v99, 88
    %v188 = vpop.permute.xlu0 %187
    %v189 = vsel %vm107, %v186, 0
    %v191 = vsel %vm107, %v188, 0
    %193 = vmatpush.xpose.msra.mxu0 0.0
    %194 = vmatpush.xpose.msra.mxu0 0.0
    %195 = vmatpush.xpose.msra.mxu0 0.0
    %196 = vmatpush.xpose.msra.mxu0 0.0
    %197 = vmatpush.xpose.msra.mxu0 0.0
    %198 = vmatpush.xpose.msra.mxu0 0.0
    %199 = vmatpush.xpose.msra.mxu0 0.0
    %200 = vmatpush.xpose.msra.mxu0 0.0
    %201 = vmatpush.xpose.msra.mxu0 0.0
    %202 = vmatpush.xpose.msra.mxu0 0.0
    %203 = vmatpush.xpose.msra.mxu0 0.0
    %204 = vmatpush.xpose.msra.mxu0 0.0
    %205 = vmatpush.xpose.msra.mxu0 0.0
    %206 = vmatpush.xpose.msra.mxu0 0.0
    %207 = vmatpush.xpose.msra.mxu0 0.0
    %208 = vmatpush.xpose.msra.mxu0 %v191
    %209 = vmatmul.f32.gmra.mxu0 %v189
    %v210 = vpop.f32.mrf.mxu0
    %v211 = vadd.f32 0.0, %v210
    %212 = vdwg.mxu0
    %v213 = vmul.f32 %v211, 0.35355338
    %v214 = vsel %vm107, %v213, -inf
    %215 = vmax.xlane.f32.xlu0 %v214
    %v216 = vpop.xlane.xlu0 %215
    %v217 = vsub.f32 %v213, %v216
    %v218 = vmul.f32 %v217, 1.442695
    %v219 = vpow.pop %v218
    %v220 = vsel %vm107, %v219, 0.0
    %221 = vadd.xlane.f32.xlu0 %v220
    %v222 = vpop.xlane.xlu0 %221
    %v223 = vrcp.pop %v222
    %v224 = vmul.f32 %v222, %v223
    %v225 = vsub.f32 1.0, %v224
    %v226 = vmul.f32 %v223, %v225
    %v227 = vadd.f32 %v223, %v226
    %vm228 = vweird.f32 %v222
    %vm229 = vweird.f32 %v223
    %vm230 = vmor %vm228, %vm229
    %v231 = vsel %vm230, %v223, %v227
    %v232 = vand.u32 2147483647, %v222
    %vm233 = vcmp.eq.f32.partialorder %v232, 8.507059e+37
    %v234 = vand.u32 %v222, 2147483648
    %v235 = vor.u32 1.1754944e-38, %v234
    %v236 = vsel %vm233, %v235, %v231
    %v237 = vmul.f32 %v219, %v236
    %239 = vrot.lane.b32.xlu0 %v237, 8
    %v240 = vpop.permute.xlu0 %239
    %vm242 = vcmask 130112
    %243 = vst.msk [vmem:[#allocation10] sm:$0xff] %vm242, %v240
    %244 = vrot.lane.b32.xlu0 %v99, 56
    %v245 = vpop.permute.xlu0 %244
    %v247 = vsel %vm107, %v237, 0
    %249 = vmatpush.msra.mxu0 0.0
    %250 = vmatpush.msra.mxu0 0.0
    %251 = vmatpush.msra.mxu0 0.0
    %252 = vmatpush.msra.mxu0 0.0
    %253 = vmatpush.msra.mxu0 0.0
    %254 = vmatpush.msra.mxu0 0.0
    %255 = vmatpush.msra.mxu0 0.0
    %256 = vmatpush.msra.mxu0 0.0
    %257 = vmatpush.msra.mxu0 0.0
    %258 = vmatpush.msra.mxu0 0.0
    %259 = vmatpush.msra.mxu0 0.0
    %260 = vmatpush.msra.mxu0 0.0
    %261 = vmatpush.msra.mxu0 0.0
    %262 = vmatpush.msra.mxu0 0.0
    %263 = vmatpush.msra.mxu0 0.0
    %264 = vmatpush.msra.mxu0 %v245
    %265 = vmatmul.f32.gmra.mxu0 %v247
    %v266 = vpop.f32.mrf.mxu0
    %v267 = vadd.f32 0.0, %v266
    %268 = vdwg.mxu0
    %270 = vrot.lane.b32.xlu0 %v267, 8
    %v271 = vpop.permute.xlu0 %270
    %273 = vst.msk [vmem:[#allocation2] sm:$0xff] %vm242, %v271
    %274 = vrot.lane.b32.xlu0 %v99, 112
    %v275 = vpop.permute.xlu0 %274
    %276 = vrot.lane.b32.xlu0 %v99, 80
    %v277 = vpop.permute.xlu0 %276
    %v278 = vsel %vm107, %v275, 0
    %v280 = vsel %vm107, %v277, 0
    %282 = vmatpush.xpose.msra.mxu0 0.0
    %283 = vmatpush.xpose.msra.mxu0 0.0
    %284 = vmatpush.xpose.msra.mxu0 0.0
    %285 = vmatpush.xpose.msra.mxu0 0.0
    %286 = vmatpush.xpose.msra.mxu0 0.0
    %287 = vmatpush.xpose.msra.mxu0 0.0
    %288 = vmatpush.xpose.msra.mxu0 0.0
    %289 = vmatpush.xpose.msra.mxu0 0.0
    %290 = vmatpush.xpose.msra.mxu0 0.0
    %291 = vmatpush.xpose.msra.mxu0 0.0
    %292 = vmatpush.xpose.msra.mxu0 0.0
    %293 = vmatpush.xpose.msra.mxu0 0.0
    %294 = vmatpush.xpose.msra.mxu0 0.0
    %295 = vmatpush.xpose.msra.mxu0 0.0
    %296 = vmatpush.xpose.msra.mxu0 0.0
    %297 = vmatpush.xpose.msra.mxu0 %v280
    %298 = vmatmul.f32.gmra.mxu0 %v278
    %v299 = vpop.f32.mrf.mxu0
    %v300 = vadd.f32 0.0, %v299
    %301 = vdwg.mxu0
    %v302 = vmul.f32 %v300, 0.35355338
    %v303 = vsel %vm107, %v302, -inf
    %304 = vmax.xlane.f32.xlu0 %v303
    %v305 = vpop.xlane.xlu0 %304
    %v306 = vsub.f32 %v302, %v305
    %v307 = vmul.f32 %v306, 1.442695
    %v308 = vpow.pop %v307
    %v309 = vsel %vm107, %v308, 0.0
    %310 = vadd.xlane.f32.xlu0 %v309
    %v311 = vpop.xlane.xlu0 %310
    %v312 = vrcp.pop %v311
    %v313 = vmul.f32 %v311, %v312
    %v314 = vsub.f32 1.0, %v313
    %v315 = vmul.f32 %v312, %v314
    %v316 = vadd.f32 %v312, %v315
    %vm317 = vweird.f32 %v311
    %vm318 = vweird.f32 %v312
    %vm319 = vmor %vm317, %vm318
    %v320 = vsel %vm319, %v312, %v316
    %v321 = vand.u32 2147483647, %v311
    %vm322 = vcmp.eq.f32.partialorder %v321, 8.507059e+37
    %v323 = vand.u32 %v311, 2147483648
    %v324 = vor.u32 1.1754944e-38, %v323
    %v325 = vsel %vm322, %v324, %v320
    %v326 = vmul.f32 %v308, %v325
    %328 = vrot.lane.b32.xlu0 %v326, 16
    %v329 = vpop.permute.xlu0 %328
    %vm331 = vcmask 195712
    %332 = vst.msk [vmem:[#allocation10] sm:$0xff] %vm331, %v329
    %333 = vrot.lane.b32.xlu0 %v99, 48
    %v334 = vpop.permute.xlu0 %333
    %v336 = vsel %vm107, %v326, 0
    %338 = vmatpush.msra.mxu0 0.0
    %339 = vmatpush.msra.mxu0 0.0
    %340 = vmatpush.msra.mxu0 0.0
    %341 = vmatpush.msra.mxu0 0.0
    %342 = vmatpush.msra.mxu0 0.0
    %343 = vmatpush.msra.mxu0 0.0
    %344 = vmatpush.msra.mxu0 0.0
    %345 = vmatpush.msra.mxu0 0.0
    %346 = vmatpush.msra.mxu0 0.0
    %347 = vmatpush.msra.mxu0 0.0
    %348 = vmatpush.msra.mxu0 0.0
    %349 = vmatpush.msra.mxu0 0.0
    %350 = vmatpush.msra.mxu0 0.0
    %351 = vmatpush.msra.mxu0 0.0
    %352 = vmatpush.msra.mxu0 0.0
    %353 = vmatpush.msra.mxu0 %v334
    %354 = vmatmul.f32.gmra.mxu0 %v336
    %v355 = vpop.f32.mrf.mxu0
    %v356 = vadd.f32 0.0, %v355
    %357 = vdwg.mxu0
    %359 = vrot.lane.b32.xlu0 %v356, 16
    %v360 = vpop.permute.xlu0 %359
    %362 = vst.msk [vmem:[#allocation2] sm:$0xff] %vm331, %v360
    %363 = vrot.lane.b32.xlu0 %v99, 104
    %v364 = vpop.permute.xlu0 %363
    %365 = vrot.lane.b32.xlu0 %v99, 72
    %v366 = vpop.permute.xlu0 %365
    %v367 = vsel %vm107, %v364, 0
    %v369 = vsel %vm107, %v366, 0
    %371 = vmatpush.xpose.msra.mxu0 0.0
    %372 = vmatpush.xpose.msra.mxu0 0.0
    %373 = vmatpush.xpose.msra.mxu0 0.0
    %374 = vmatpush.xpose.msra.mxu0 0.0
    %375 = vmatpush.xpose.msra.mxu0 0.0
    %376 = vmatpush.xpose.msra.mxu0 0.0
    %377 = vmatpush.xpose.msra.mxu0 0.0
    %378 = vmatpush.xpose.msra.mxu0 0.0
    %379 = vmatpush.xpose.msra.mxu0 0.0
    %380 = vmatpush.xpose.msra.mxu0 0.0
    %381 = vmatpush.xpose.msra.mxu0 0.0
    %382 = vmatpush.xpose.msra.mxu0 0.0
    %383 = vmatpush.xpose.msra.mxu0 0.0
    %384 = vmatpush.xpose.msra.mxu0 0.0
    %385 = vmatpush.xpose.msra.mxu0 0.0
    %386 = vmatpush.xpose.msra.mxu0 %v369
    %387 = vmatmul.f32.gmra.mxu0 %v367
    %v388 = vpop.f32.mrf.mxu0
    %v389 = vadd.f32 0.0, %v388
    %390 = vdwg.mxu0
    %v391 = vmul.f32 %v389, 0.35355338
    %v392 = vsel %vm107, %v391, -inf
    %393 = vmax.xlane.f32.xlu0 %v392
    %v394 = vpop.xlane.xlu0 %393
    %v395 = vsub.f32 %v391, %v394
    %v396 = vmul.f32 %v395, 1.442695
    %v397 = vpow.pop %v396
    %v398 = vsel %vm107, %v397, 0.0
    %399 = vadd.xlane.f32.xlu0 %v398
    %v400 = vpop.xlane.xlu0 %399
    %v401 = vrcp.pop %v400
    %v402 = vmul.f32 %v400, %v401
    %v403 = vsub.f32 1.0, %v402
    %v404 = vmul.f32 %v401, %v403
    %v405 = vadd.f32 %v401, %v404
    %vm406 = vweird.f32 %v400
    %vm407 = vweird.f32 %v401
    %vm408 = vmor %vm406, %vm407
    %v409 = vsel %vm408, %v401, %v405
    %v410 = vand.u32 2147483647, %v400
    %vm411 = vcmp.eq.f32.partialorder %v410, 8.507059e+37
    %v412 = vand.u32 %v400, 2147483648
    %v413 = vor.u32 1.1754944e-38, %v412
    %v414 = vsel %vm411, %v413, %v409
    %v415 = vmul.f32 %v397, %v414
    %417 = vrot.lane.b32.xlu0 %v415, 24
    %v418 = vpop.permute.xlu0 %417
    %vm420 = vcmask 261312
    %421 = vst.msk [vmem:[#allocation10] sm:$0xff] %vm420, %v418
    %422 = vrot.lane.b32.xlu0 %v99, 40
    %v423 = vpop.permute.xlu0 %422
    %v425 = vsel %vm107, %v415, 0
    %427 = vmatpush.msra.mxu0 0.0
    %428 = vmatpush.msra.mxu0 0.0
    %429 = vmatpush.msra.mxu0 0.0
    %430 = vmatpush.msra.mxu0 0.0
    %431 = vmatpush.msra.mxu0 0.0
    %432 = vmatpush.msra.mxu0 0.0
    %433 = vmatpush.msra.mxu0 0.0
    %434 = vmatpush.msra.mxu0 0.0
    %435 = vmatpush.msra.mxu0 0.0
    %436 = vmatpush.msra.mxu0 0.0
    %437 = vmatpush.msra.mxu0 0.0
    %438 = vmatpush.msra.mxu0 0.0
    %439 = vmatpush.msra.mxu0 0.0
    %440 = vmatpush.msra.mxu0 0.0
    %441 = vmatpush.msra.mxu0 0.0
    %442 = vmatpush.msra.mxu0 %v423
    %443 = vmatmul.f32.gmra.mxu0 %v425
    %v444 = vpop.f32.mrf.mxu0
    %v445 = vadd.f32 0.0, %v444
    %446 = vdwg.mxu0
    %448 = vrot.lane.b32.xlu0 %v445, 24
    %v449 = vpop.permute.xlu0 %448
    %451 = vst.msk [vmem:[#allocation2] sm:$0xff] %vm420, %v449
    %453 = vrot.lane.b32.xlu0 %v102, 96
    %v454 = vpop.permute.xlu0 %453
    %v455 = vsel %vm107, %v102, 0
    %v457 = vsel %vm107, %v454, 0
    %459 = vmatpush.xpose.msra.mxu0 0.0
    %460 = vmatpush.xpose.msra.mxu0 0.0
    %461 = vmatpush.xpose.msra.mxu0 0.0
    %462 = vmatpush.xpose.msra.mxu0 0.0
    %463 = vmatpush.xpose.msra.mxu0 0.0
    %464 = vmatpush.xpose.msra.mxu0 0.0
    %465 = vmatpush.xpose.msra.mxu0 0.0
    %466 = vmatpush.xpose.msra.mxu0 0.0
    %467 = vmatpush.xpose.msra.mxu0 0.0
    %468 = vmatpush.xpose.msra.mxu0 0.0
    %469 = vmatpush.xpose.msra.mxu0 0.0
    %470 = vmatpush.xpose.msra.mxu0 0.0
    %471 = vmatpush.xpose.msra.mxu0 0.0
    %472 = vmatpush.xpose.msra.mxu0 0.0
    %473 = vmatpush.xpose.msra.mxu0 0.0
    %474 = vmatpush.xpose.msra.mxu0 %v457
    %475 = vmatmul.f32.gmra.mxu0 %v455
    %v476 = vpop.f32.mrf.mxu0
    %v477 = vadd.f32 0.0, %v476
    %478 = vdwg.mxu0
    %v479 = vmul.f32 %v477, 0.35355338
    %v480 = vsel %vm107, %v479, -inf
    %481 = vmax.xlane.f32.xlu0 %v480
    %v482 = vpop.xlane.xlu0 %481
    %v483 = vsub.f32 %v479, %v482
    %v484 = vmul.f32 %v483, 1.442695
    %v485 = vpow.pop %v484
    %v486 = vsel %vm107, %v485, 0.0
    %487 = vadd.xlane.f32.xlu0 %v486
    %v488 = vpop.xlane.xlu0 %487
    %v489 = vrcp.pop %v488
    %v490 = vmul.f32 %v488, %v489
    %v491 = vsub.f32 1.0, %v490
    %v492 = vmul.f32 %v489, %v491
    %v493 = vadd.f32 %v489, %v492
    %vm494 = vweird.f32 %v488
    %vm495 = vweird.f32 %v489
    %vm496 = vmor %vm494, %vm495
    %v497 = vsel %vm496, %v489, %v493
    %v498 = vand.u32 2147483647, %v488
    %vm499 = vcmp.eq.f32.partialorder %v498, 8.507059e+37
    %v500 = vand.u32 %v488, 2147483648
    %v501 = vor.u32 1.1754944e-38, %v500
    %v502 = vsel %vm499, %v501, %v497
    %v503 = vmul.f32 %v485, %v502
    %504 = vst.msk [vmem:[#allocation10 + $0x8] sm:$0xff] %vm107, %v503
    %505 = vrot.lane.b32.xlu0 %v102, 64
    %v506 = vpop.permute.xlu0 %505
    %v509 = vsel %vm107, %v503, 0
    %511 = vmatpush.msra.mxu0 0.0
    %512 = vmatpush.msra.mxu0 0.0
    %513 = vmatpush.msra.mxu0 0.0
    %514 = vmatpush.msra.mxu0 0.0
    %515 = vmatpush.msra.mxu0 0.0
    %516 = vmatpush.msra.mxu0 0.0
    %517 = vmatpush.msra.mxu0 0.0
    %518 = vmatpush.msra.mxu0 0.0
    %519 = vmatpush.msra.mxu0 0.0
    %520 = vmatpush.msra.mxu0 0.0
    %521 = vmatpush.msra.mxu0 0.0
    %522 = vmatpush.msra.mxu0 0.0
    %523 = vmatpush.msra.mxu0 0.0
    %524 = vmatpush.msra.mxu0 0.0
    %525 = vmatpush.msra.mxu0 0.0
    %526 = vmatpush.msra.mxu0 %v506
    %527 = vmatmul.f32.gmra.mxu0 %v509
    %v528 = vpop.f32.mrf.mxu0
    %v529 = vadd.f32 0.0, %v528
    %530 = vdwg.mxu0
    %531 = vst.msk [vmem:[#allocation2 + $0x8] sm:$0xff] %vm107, %v529
    %532 = vrot.lane.b32.xlu0 %v102, 120
    %v533 = vpop.permute.xlu0 %532
    %534 = vrot.lane.b32.xlu0 %v102, 88
    %v535 = vpop.permute.xlu0 %534
    %v536 = vsel %vm107, %v533, 0
    %v538 = vsel %vm107, %v535, 0
    %540 = vmatpush.xpose.msra.mxu0 0.0
    %541 = vmatpush.xpose.msra.mxu0 0.0
    %542 = vmatpush.xpose.msra.mxu0 0.0
    %543 = vmatpush.xpose.msra.mxu0 0.0
    %544 = vmatpush.xpose.msra.mxu0 0.0
    %545 = vmatpush.xpose.msra.mxu0 0.0
    %546 = vmatpush.xpose.msra.mxu0 0.0
    %547 = vmatpush.xpose.msra.mxu0 0.0
    %548 = vmatpush.xpose.msra.mxu0 0.0
    %549 = vmatpush.xpose.msra.mxu0 0.0
    %550 = vmatpush.xpose.msra.mxu0 0.0
    %551 = vmatpush.xpose.msra.mxu0 0.0
    %552 = vmatpush.xpose.msra.mxu0 0.0
    %553 = vmatpush.xpose.msra.mxu0 0.0
    %554 = vmatpush.xpose.msra.mxu0 0.0
    %555 = vmatpush.xpose.msra.mxu0 %v538
    %556 = vmatmul.f32.gmra.mxu0 %v536
    %v557 = vpop.f32.mrf.mxu0
    %v558 = vadd.f32 0.0, %v557
    %559 = vdwg.mxu0
    %v560 = vmul.f32 %v558, 0.35355338
    %v561 = vsel %vm107, %v560, -inf
    %562 = vmax.xlane.f32.xlu0 %v561
    %v563 = vpop.xlane.xlu0 %562
    %v564 = vsub.f32 %v560, %v563
    %v565 = vmul.f32 %v564, 1.442695
    %v566 = vpow.pop %v565
    %v567 = vsel %vm107, %v566, 0.0
    %568 = vadd.xlane.f32.xlu0 %v567
    %v569 = vpop.xlane.xlu0 %568
    %v570 = vrcp.pop %v569
    %v571 = vmul.f32 %v569, %v570
    %v572 = vsub.f32 1.0, %v571
    %v573 = vmul.f32 %v570, %v572
    %v574 = vadd.f32 %v570, %v573
    %vm575 = vweird.f32 %v569
    %vm576 = vweird.f32 %v570
    %vm577 = vmor %vm575, %vm576
    %v578 = vsel %vm577, %v570, %v574
    %v579 = vand.u32 2147483647, %v569
    %vm580 = vcmp.eq.f32.partialorder %v579, 8.507059e+37
    %v581 = vand.u32 %v569, 2147483648
    %v582 = vor.u32 1.1754944e-38, %v581
    %v583 = vsel %vm580, %v582, %v578
    %v584 = vmul.f32 %v566, %v583
    %586 = vrot.lane.b32.xlu0 %v584, 8
    %v587 = vpop.permute.xlu0 %586
    %589 = vst.msk [vmem:[#allocation10 + $0x8] sm:$0xff] %vm242, %v587
    %590 = vrot.lane.b32.xlu0 %v102, 56
    %v591 = vpop.permute.xlu0 %590
    %v593 = vsel %vm107, %v584, 0
    %595 = vmatpush.msra.mxu0 0.0
    %596 = vmatpush.msra.mxu0 0.0
    %597 = vmatpush.msra.mxu0 0.0
    %598 = vmatpush.msra.mxu0 0.0
    %599 = vmatpush.msra.mxu0 0.0
    %600 = vmatpush.msra.mxu0 0.0
    %601 = vmatpush.msra.mxu0 0.0
    %602 = vmatpush.msra.mxu0 0.0
    %603 = vmatpush.msra.mxu0 0.0
    %604 = vmatpush.msra.mxu0 0.0
    %605 = vmatpush.msra.mxu0 0.0
    %606 = vmatpush.msra.mxu0 0.0
    %607 = vmatpush.msra.mxu0 0.0
    %608 = vmatpush.msra.mxu0 0.0
    %609 = vmatpush.msra.mxu0 0.0
    %610 = vmatpush.msra.mxu0 %v591
    %611 = vmatmul.f32.gmra.mxu0 %v593
    %v612 = vpop.f32.mrf.mxu0
    %v613 = vadd.f32 0.0, %v612
    %614 = vdwg.mxu0
    %616 = vrot.lane.b32.xlu0 %v613, 8
    %v617 = vpop.permute.xlu0 %616
    %619 = vst.msk [vmem:[#allocation2 + $0x8] sm:$0xff] %vm242, %v617
    %620 = vrot.lane.b32.xlu0 %v102, 112
    %v621 = vpop.permute.xlu0 %620
    %622 = vrot.lane.b32.xlu0 %v102, 80
    %v623 = vpop.permute.xlu0 %622
    %v624 = vsel %vm107, %v621, 0
    %v626 = vsel %vm107, %v623, 0
    %628 = vmatpush.xpose.msra.mxu0 0.0
    %629 = vmatpush.xpose.msra.mxu0 0.0
    %630 = vmatpush.xpose.msra.mxu0 0.0
    %631 = vmatpush.xpose.msra.mxu0 0.0
    %632 = vmatpush.xpose.msra.mxu0 0.0
    %633 = vmatpush.xpose.msra.mxu0 0.0
    %634 = vmatpush.xpose.msra.mxu0 0.0
    %635 = vmatpush.xpose.msra.mxu0 0.0
    %636 = vmatpush.xpose.msra.mxu0 0.0
    %637 = vmatpush.xpose.msra.mxu0 0.0
    %638 = vmatpush.xpose.msra.mxu0 0.0
    %639 = vmatpush.xpose.msra.mxu0 0.0
    %640 = vmatpush.xpose.msra.mxu0 0.0
    %641 = vmatpush.xpose.msra.mxu0 0.0
    %642 = vmatpush.xpose.msra.mxu0 0.0
    %643 = vmatpush.xpose.msra.mxu0 %v626
    %644 = vmatmul.f32.gmra.mxu0 %v624
    %v645 = vpop.f32.mrf.mxu0
    %v646 = vadd.f32 0.0, %v645
    %647 = vdwg.mxu0
    %v648 = vmul.f32 %v646, 0.35355338
    %v649 = vsel %vm107, %v648, -inf
    %650 = vmax.xlane.f32.xlu0 %v649
    %v651 = vpop.xlane.xlu0 %650
    %v652 = vsub.f32 %v648, %v651
    %v653 = vmul.f32 %v652, 1.442695
    %v654 = vpow.pop %v653
    %v655 = vsel %vm107, %v654, 0.0
    %656 = vadd.xlane.f32.xlu0 %v655
    %v657 = vpop.xlane.xlu0 %656
    %v658 = vrcp.pop %v657
    %v659 = vmul.f32 %v657, %v658
    %v660 = vsub.f32 1.0, %v659
    %v661 = vmul.f32 %v658, %v660
    %v662 = vadd.f32 %v658, %v661
    %vm663 = vweird.f32 %v657
    %vm664 = vweird.f32 %v658
    %vm665 = vmor %vm663, %vm664
    %v666 = vsel %vm665, %v658, %v662
    %v667 = vand.u32 2147483647, %v657
    %vm668 = vcmp.eq.f32.partialorder %v667, 8.507059e+37
    %v669 = vand.u32 %v657, 2147483648
    %v670 = vor.u32 1.1754944e-38, %v669
    %v671 = vsel %vm668, %v670, %v666
    %v672 = vmul.f32 %v654, %v671
    %674 = vrot.lane.b32.xlu0 %v672, 16
    %v675 = vpop.permute.xlu0 %674
    %677 = vst.msk [vmem:[#allocation10 + $0x8] sm:$0xff] %vm331, %v675
    %678 = vrot.lane.b32.xlu0 %v102, 48
    %v679 = vpop.permute.xlu0 %678
    %v681 = vsel %vm107, %v672, 0
    %683 = vmatpush.msra.mxu0 0.0
    %684 = vmatpush.msra.mxu0 0.0
    %685 = vmatpush.msra.mxu0 0.0
    %686 = vmatpush.msra.mxu0 0.0
    %687 = vmatpush.msra.mxu0 0.0
    %688 = vmatpush.msra.mxu0 0.0
    %689 = vmatpush.msra.mxu0 0.0
    %690 = vmatpush.msra.mxu0 0.0
    %691 = vmatpush.msra.mxu0 0.0
    %692 = vmatpush.msra.mxu0 0.0
    %693 = vmatpush.msra.mxu0 0.0
    %694 = vmatpush.msra.mxu0 0.0
    %695 = vmatpush.msra.mxu0 0.0
    %696 = vmatpush.msra.mxu0 0.0
    %697 = vmatpush.msra.mxu0 0.0
    %698 = vmatpush.msra.mxu0 %v679
    %699 = vmatmul.f32.gmra.mxu0 %v681
    %v700 = vpop.f32.mrf.mxu0
    %v701 = vadd.f32 0.0, %v700
    %702 = vdwg.mxu0
    %704 = vrot.lane.b32.xlu0 %v701, 16
    %v705 = vpop.permute.xlu0 %704
    %707 = vst.msk [vmem:[#allocation2 + $0x8] sm:$0xff] %vm331, %v705
    %708 = vrot.lane.b32.xlu0 %v102, 104
    %v709 = vpop.permute.xlu0 %708
    %710 = vrot.lane.b32.xlu0 %v102, 72
    %v711 = vpop.permute.xlu0 %710
    %v712 = vsel %vm107, %v709, 0
    %v714 = vsel %vm107, %v711, 0
    %716 = vmatpush.xpose.msra.mxu0 0.0
    %717 = vmatpush.xpose.msra.mxu0 0.0
    %718 = vmatpush.xpose.msra.mxu0 0.0
    %719 = vmatpush.xpose.msra.mxu0 0.0
    %720 = vmatpush.xpose.msra.mxu0 0.0
    %721 = vmatpush.xpose.msra.mxu0 0.0
    %722 = vmatpush.xpose.msra.mxu0 0.0
    %723 = vmatpush.xpose.msra.mxu0 0.0
    %724 = vmatpush.xpose.msra.mxu0 0.0
    %725 = vmatpush.xpose.msra.mxu0 0.0
    %726 = vmatpush.xpose.msra.mxu0 0.0
    %727 = vmatpush.xpose.msra.mxu0 0.0
    %728 = vmatpush.xpose.msra.mxu0 0.0
    %729 = vmatpush.xpose.msra.mxu0 0.0
    %730 = vmatpush.xpose.msra.mxu0 0.0
    %731 = vmatpush.xpose.msra.mxu0 %v714
    %732 = vmatmul.f32.gmra.mxu0 %v712
    %v733 = vpop.f32.mrf.mxu0
    %v734 = vadd.f32 0.0, %v733
    %735 = vdwg.mxu0
    %v736 = vmul.f32 %v734, 0.35355338
    %v737 = vsel %vm107, %v736, -inf
    %738 = vmax.xlane.f32.xlu0 %v737
    %v739 = vpop.xlane.xlu0 %738
    %v740 = vsub.f32 %v736, %v739
    %v741 = vmul.f32 %v740, 1.442695
    %v742 = vpow.pop %v741
    %v743 = vsel %vm107, %v742, 0.0
    %744 = vadd.xlane.f32.xlu0 %v743
    %v745 = vpop.xlane.xlu0 %744
    %v746 = vrcp.pop %v745
    %v747 = vmul.f32 %v745, %v746
    %v748 = vsub.f32 1.0, %v747
    %v749 = vmul.f32 %v746, %v748
    %v750 = vadd.f32 %v746, %v749
    %vm751 = vweird.f32 %v745
    %vm752 = vweird.f32 %v746
    %vm753 = vmor %vm751, %vm752
    %v754 = vsel %vm753, %v746, %v750
    %v755 = vand.u32 2147483647, %v745
    %vm756 = vcmp.eq.f32.partialorder %v755, 8.507059e+37
    %v757 = vand.u32 %v745, 2147483648
    %v758 = vor.u32 1.1754944e-38, %v757
    %v759 = vsel %vm756, %v758, %v754
    %v760 = vmul.f32 %v742, %v759
    %762 = vrot.lane.b32.xlu0 %v760, 24
    %v763 = vpop.permute.xlu0 %762
    %765 = vst.msk [vmem:[#allocation10 + $0x8] sm:$0xff] %vm420, %v763
    %766 = vrot.lane.b32.xlu0 %v102, 40
    %v767 = vpop.permute.xlu0 %766
    %v769 = vsel %vm107, %v760, 0
    %771 = vmatpush.msra.mxu0 0.0
    %772 = vmatpush.msra.mxu0 0.0
    %773 = vmatpush.msra.mxu0 0.0
    %774 = vmatpush.msra.mxu0 0.0
    %775 = vmatpush.msra.mxu0 0.0
    %776 = vmatpush.msra.mxu0 0.0
    %777 = vmatpush.msra.mxu0 0.0
    %778 = vmatpush.msra.mxu0 0.0
    %779 = vmatpush.msra.mxu0 0.0
    %780 = vmatpush.msra.mxu0 0.0
    %781 = vmatpush.msra.mxu0 0.0
    %782 = vmatpush.msra.mxu0 0.0
    %783 = vmatpush.msra.mxu0 0.0
    %784 = vmatpush.msra.mxu0 0.0
    %785 = vmatpush.msra.mxu0 0.0
    %786 = vmatpush.msra.mxu0 %v767
    %787 = vmatmul.f32.gmra.mxu0 %v769
    %v788 = vpop.f32.mrf.mxu0
    %v789 = vadd.f32 0.0, %v788
    %790 = vdwg.mxu0
    %792 = vrot.lane.b32.xlu0 %v789, 24
    %v793 = vpop.permute.xlu0 %792
    %795 = vst.msk [vmem:[#allocation2 + $0x8] sm:$0xff] %vm420, %v793
    %v796 = vld [vmem:[#allocation2] sm:$0xff]
    %v797 = vld [vmem:[#allocation2 + $0x8] sm:$0xff]
    %v798 = vld [vmem:[#allocation8] sm:$0xff]
    %v799 = vld [vmem:[#allocation8 + $0x8] sm:$0xff]
    %v800 = vld [vmem:[#allocation8 + $0x10] sm:$0xff]
    %v801 = vld [vmem:[#allocation8 + $0x18] sm:$0xff]
    %v802 = vld [vmem:[%s3] sm:$0x1]
    %v804 = vperm.slane %v802, 0
    %v807 = vsel %vm74, %v796, 0
    %v810 = vsel %vm74, %v797, 0
    %812 = vmatpush.msra.mxu0 0.0
    %813 = vmatpush.msra.mxu0 0.0
    %814 = vmatpush.msra.mxu0 0.0
    %815 = vmatpush.msra.mxu0 0.0
    %816 = vmatpush.msra.mxu0 0.0
    %817 = vmatpush.msra.mxu0 0.0
    %818 = vmatpush.msra.mxu0 0.0
    %819 = vmatpush.msra.mxu0 0.0
    %820 = vmatpush.msra.mxu0 0.0
    %821 = vmatpush.msra.mxu0 0.0
    %822 = vmatpush.msra.mxu0 0.0
    %823 = vmatpush.msra.mxu0 0.0
    %824 = vmatpush.msra.mxu0 %v801
    %825 = vmatpush.msra.mxu0 %v800
    %826 = vmatpush.msra.mxu0 %v799
    %827 = vmatpush.msra.mxu0 %v798
    %828 = vmatmul.f32.gmra.mxu0 %v807
    %v829 = vpop.f32.mrf.mxu0
    %v830 = vadd.f32 %v804, %v829
    %831 = vmatmul.f32.gmra.mxu0 %v810
    %v832 = vpop.f32.mrf.mxu0
    %v833 = vadd.f32 %v804, %v832
    %834 = vdwg.mxu0
    %835 = vst.msk [vmem:[#allocation9] sm:$0xff] %vm74, %v830
    %836 = vst.msk [vmem:[#allocation9 + $0x8] sm:$0xff] %vm74, %v833
    // Predicated region
    $region30: #{tpu_custom_call.1} parent=1 // pred_check
      _
    $region31: #{tpu_custom_call.1} parent=1 // pred_check_branch
      %838 = sbr.rel (0) target = $region33
    $region32: #{tpu_custom_call.1} parent=1 // pred_region
      %840 = vsyncadd [#allocation5], 0
      %s841 = sshll.u32 [#allocation9], 4
      %s842 = int_to_ptr.vmem [resolvable:$true] %s841
      %s843 = sshll.u32 %s4, 4
      %s844 = int_to_ptr.hbm [resolvable:$true] %s843
      %849 = dma.vmem_to_hbm [thread:$0]  %s842, 256, %s844, [#allocation5], 128, 128, 8
    $region33: #{tpu_custom_call.1} parent=1 // pred_fallthru
      _
    // Predicated region
    $region34: #{tpu_custom_call.1} parent=1 // pred_check
      _
    $region35: #{tpu_custom_call.1} parent=1 // pred_check_branch
      %851 = sbr.rel (0) target = $region37
    $region36: #{tpu_custom_call.1} parent=1 // pred_region
      %853 = vsyncadd [#allocation11], 0
      %s854 = sshll.u32 [#allocation10], 4
      %s855 = int_to_ptr.vmem [resolvable:$true] %s854
      %s856 = sshll.u32 %s5, 4
      %s857 = int_to_ptr.hbm [resolvable:$true] %s856
      %862 = dma.vmem_to_hbm [thread:$0]  %s855, 256, %s857, [#allocation11], 128, 128, 8
    $region37: #{tpu_custom_call.1} parent=1 // pred_fallthru
      _
    // Predicated region
    $region38: #{tpu_custom_call.1} parent=1 // pred_check
      _
    $region39: #{tpu_custom_call.1} parent=1 // pred_check_branch
      %864 = sbr.rel (0) target = $region41
    $region40: #{tpu_custom_call.1} parent=1 // pred_region
      %866 = dma.done [#allocation5], 256
    $region41: #{tpu_custom_call.1} parent=1 // pred_fallthru
      _
    // Predicated region
    $region42: #{tpu_custom_call.1} parent=1 // pred_check
      _
    $region43: #{tpu_custom_call.1} parent=1 // pred_check_branch
      %868 = sbr.rel (0) target = $region45
    $region44: #{tpu_custom_call.1} parent=1 // pred_region
      %870 = dma.done [#allocation11], 256
    $region45: #{tpu_custom_call.1} parent=1 // pred_fallthru
      _
    %871 = vsyncpa [#allocation4], 1
    %872 = vsyncpa [#allocation7], 1
    %873 = vsyncpa [#allocation5], 1
    %874 = vsyncpa [#allocation11], 1

</llo_original>
